<compile_context>
chip_gen: v5e
topology: v5e:2x2
jax: 0.10.0
libtpu: 0.0.40
codegen_flags: <defaults>
</compile_context>

<pallas_src>
import functools

import jax
import jax.numpy as jnp
from jax.experimental import pallas as pl
from jax.experimental.pallas import tpu as pltpu


def _round_up(x, m):
    return (x + m - 1) // m * m


def _cdiv(a, b):
    return -(-a // b)


def _nw_kernel(w_ref, q_ref, k_ref, v_ref, o_ref):
    # w_ref: (1, 1) f32 scalar in SMEM
    # q_ref: (TM, 1), k_ref/v_ref: (TM, K) in the caller's native dtype
    # o_ref: (TM, 1) f32
    w = w_ref[0, 0]
    c = -0.5 * w * w                        # folded scalar: logits = c * (q-k)^2

    q = q_ref[...].astype(jnp.float32)      # in-kernel upcast (free under HBM bound)
    k = k_ref[...].astype(jnp.float32)
    v = v_ref[...].astype(jnp.float32)

    d = q - k                               # (TM, K); q broadcasts over lanes
    logits = d * d * c                      # (TM, K), always <= 0

    # Numerically stable softmax over axis=1 (lane axis).  Keep the row max:
    # it matches torch.softmax and prevents 0/0 NaN when every exp underflows.
    m = jnp.max(logits, axis=1, keepdims=True)          # (TM, 1)
    e = jnp.exp(logits - m)                              # (TM, K)
    denom = jnp.sum(e, axis=1, keepdims=True)            # (TM, 1)
    inv = pl.reciprocal(denom, approx=True)              # EUP vrcp (free slot)
    attn = e * inv                                       # (TM, K)

    # Per-row weighted sum of values: VPU multiply + XLU lane reduce (no MXU).
    o_ref[...] = jnp.sum(attn * v, axis=1, keepdims=True).astype(o_ref.dtype)


@functools.partial(jax.jit, static_argnames=("block_rows",))
def nw_kernel_regression(queries, keys, values, w, *, block_rows=16384):
    """queries: (N,), keys: (N, K), values: (N, K), w: scalar.
    Returns (N,) float32 matching NWKernelRegression.forward."""
    n, k = keys.shape
    q2d = queries.reshape(n, 1)                      # native dtype, no astype
    w2d = jnp.asarray(w, jnp.float32).reshape(1, 1)

    # ---- row-tile derivation ------------------------------------------------
    # Per-row VMEM footprint of one pipeline buffer, with Mosaic's 128-lane
    # padding: keys + values tiles plus the lane-padded (tm,1) q and f32 out
    # columns.  x2 for double buffering.  36 MiB of tile buffers stays under
    # the 48 MiB scoped limit requested below (safe on v7x's 64 MiB/TC).
    k_lanes = _round_up(k, 128)
    bytes_per_row = (
        k_lanes * (keys.dtype.itemsize + values.dtype.itemsize)
        + 128 * queries.dtype.itemsize
        + 128 * 4
    )
    vmem_budget = 36 * 1024 * 1024
    max_rows = max(32, (vmem_budget // (2 * bytes_per_row)) // 32 * 32)
    cap = max(32, (min(int(block_rows), int(max_rows)) // 32) * 32)

    # Split N evenly: >=2 tiles whenever possible (v7x megacore needs >1 grid
    # step on the "parallel" axis), each tile rounded to 32 rows so padding
    # waste is <32 rows per tile instead of rounding N up to a multiple of tm.
    min_tiles = 2 if n >= 64 else 1
    num_tiles = max(min_tiles, _cdiv(n, cap))
    tm = _round_up(_cdiv(n, num_tiles), 32)
    n_pad = tm * num_tiles

    if n_pad != n:
        pad = ((0, n_pad - n), (0, 0))
        q2d = jnp.pad(q2d, pad)        # zero rows -> finite math, sliced off
        keys = jnp.pad(keys, pad)
        values = jnp.pad(values, pad)

    out = pl.pallas_call(
        _nw_kernel,
        out_shape=jax.ShapeDtypeStruct((n_pad, 1), jnp.float32),
        grid=(num_tiles,),
        in_specs=[
            pl.BlockSpec(memory_space=pltpu.MemorySpace.SMEM),   # w scalar
            pl.BlockSpec((tm, 1), lambda i: (i, 0)),             # queries column
            pl.BlockSpec((tm, k), lambda i: (i, 0)),             # keys tile
            pl.BlockSpec((tm, k), lambda i: (i, 0)),             # values tile
        ],
        out_specs=pl.BlockSpec((tm, 1), lambda i: (i, 0)),
        compiler_params=pltpu.CompilerParams(
            dimension_semantics=("parallel",),     # megacore shards over N
            vmem_limit_bytes=48 * 1024 * 1024,     # big tiles; <=48 MiB for v7x
        ),
    )(w2d, q2d, keys, values)
    return out[:n, 0]


def _reference(queries, keys, values, w):
    q = jnp.repeat(queries, keys.shape[1]).reshape(-1, keys.shape[1])
    logits = -(((q - keys) * w) ** 2) / 2.0
    attn = jax.nn.softmax(logits, axis=1)
    return jnp.einsum("nk,nk->n", attn, values)


if __name__ == "__main__":
    root = jax.random.PRNGKey(0)
    kq, kk, kv, kw = jax.random.split(root, 4)

    # d2l-style problem size: 50 query points, 49 key-value pairs each.
    N, K = 50, 49
    queries = jax.random.normal(kq, (N,), dtype=jnp.float32) * 2.5
    keys = jax.random.normal(kk, (N, K), dtype=jnp.float32) * 2.5
    values = jax.random.normal(kv, (N, K), dtype=jnp.float32)
    # deterministic init of the module's single parameter (torch.rand((1,)))
    w = jax.random.uniform(kw, (), dtype=jnp.float32)

    out = jax.block_until_ready(nw_kernel_regression(queries, keys, values, w))
    ref = _reference(queries, keys, values, w)
    assert out.shape == (N,)
    # approx=True reciprocal (EUP) carries ~1e-4-level relative error
    assert jnp.allclose(out, ref, atol=1e-3, rtol=1e-3), (out, ref)

    # Multi-tile path: grid > 1, uneven N, small block_rows override.
    N2 = 4096 + 37
    q2 = jax.random.normal(kq, (N2,), dtype=jnp.float32)
    k2 = jax.random.normal(kk, (N2, K), dtype=jnp.float32) * 1.5
    v2 = jax.random.normal(kv, (N2, K), dtype=jnp.float32)
    out2 = jax.block_until_ready(
        nw_kernel_regression(q2, k2, v2, w, block_rows=1024))
    ref2 = _reference(q2, k2, v2, w)
    assert out2.shape == (N2,)
    assert jnp.allclose(out2, ref2, atol=1e-3, rtol=1e-3), (out2, ref2)

    # Native-dtype path: bf16 inputs are DMA'd as bf16 and upcast in-kernel.
    qb = q2[:300].astype(jnp.bfloat16)
    kb = k2[:300].astype(jnp.bfloat16)
    vb = v2[:300].astype(jnp.bfloat16)
    out3 = jax.block_until_ready(nw_kernel_regression(qb, kb, vb, w))
    ref3 = _reference(qb.astype(jnp.float32), kb.astype(jnp.float32),
                      vb.astype(jnp.float32), w)
    assert out3.shape == (300,)
    assert jnp.allclose(out3, ref3, atol=1e-3, rtol=1e-3), (out3, ref3)

    print("KERNEL_OK")
</pallas_src>

<mosaic_0001>
module attributes {stable_mosaic.version = 11 : i64} {
  func.func @_nw_kernel(%arg0: i32, %arg1: memref<1x1xf32, #tpu.memory_space<smem>>, %arg2: memref<64x1xf32, #tpu.memory_space<vmem>>, %arg3: memref<64x49xf32, #tpu.memory_space<vmem>>, %arg4: memref<64x49xf32, #tpu.memory_space<vmem>>, %arg5: memref<64x1xf32, #tpu.memory_space<vmem>>) attributes {dimension_semantics = [#tpu.dimension_semantics<parallel>], iteration_bounds = array<i64: 1>, scalar_prefetch = 0 : i64, scratch_operands = 0 : i64, tpu.core_type = #tpu.core_type<tc>, window_params = [{transform_indices = @transform_0, window_bounds = array<i64: 1, 1>}, {transform_indices = @transform_1, window_bounds = array<i64: 64, 1>}, {transform_indices = @transform_2, window_bounds = array<i64: 64, 49>}, {transform_indices = @transform_3, window_bounds = array<i64: 64, 49>}, {transform_indices = @transform_4, window_bounds = array<i64: 64, 1>}]} {
    %c0 = arith.constant 0 : index
    %c0_0 = arith.constant 0 : index
    %0 = memref.load %arg1[%c0, %c0_0] : memref<1x1xf32, #tpu.memory_space<smem>>
    %cst = arith.constant -5.000000e-01 : f32
    %1 = arith.mulf %cst, %0 : f32
    %2 = arith.mulf %1, %0 : f32
    %c0_1 = arith.constant 0 : index
    %c0_2 = arith.constant 0 : index
    %3 = vector.load %arg2[%c0_1, %c0_2] : memref<64x1xf32, #tpu.memory_space<vmem>>, vector<64x1xf32>
    %c0_3 = arith.constant 0 : index
    %c0_4 = arith.constant 0 : index
    %4 = vector.load %arg3[%c0_3, %c0_4] : memref<64x49xf32, #tpu.memory_space<vmem>>, vector<64x49xf32>
    %c0_5 = arith.constant 0 : index
    %c0_6 = arith.constant 0 : index
    %5 = vector.load %arg4[%c0_5, %c0_6] : memref<64x49xf32, #tpu.memory_space<vmem>>, vector<64x49xf32>
    %6 = vector.broadcast %3 : vector<64x1xf32> to vector<64x49xf32>
    %7 = arith.subf %6, %4 : vector<64x49xf32>
    %8 = arith.mulf %7, %7 : vector<64x49xf32>
    %9 = vector.broadcast %2 : f32 to vector<64x49xf32>
    %10 = arith.mulf %8, %9 : vector<64x49xf32>
    %cst_7 = arith.constant dense<0xFF800000> : vector<64xf32>
    %11 = vector.multi_reduction <maximumf>, %10, %cst_7 [1] : vector<64x49xf32> to vector<64xf32>
    %12 = vector.shape_cast %11 : vector<64xf32> to vector<64x1xf32>
    %13 = vector.broadcast %12 : vector<64x1xf32> to vector<64x49xf32>
    %14 = arith.subf %10, %13 : vector<64x49xf32>
    %15 = math.exp %14 : vector<64x49xf32>
    %cst_8 = arith.constant dense<0.000000e+00> : vector<64xf32>
    %16 = vector.multi_reduction <add>, %15, %cst_8 [1] : vector<64x49xf32> to vector<64xf32>
    %17 = vector.shape_cast %16 : vector<64xf32> to vector<64x1xf32>
    %18 = tpu.reciprocal %17 {approx = true} : vector<64x1xf32> -> vector<64x1xf32>
    %19 = vector.broadcast %18 : vector<64x1xf32> to vector<64x49xf32>
    %20 = arith.mulf %15, %19 : vector<64x49xf32>
    %21 = arith.mulf %20, %5 : vector<64x49xf32>
    %cst_9 = arith.constant dense<0.000000e+00> : vector<64xf32>
    %22 = vector.multi_reduction <add>, %21, %cst_9 [1] : vector<64x49xf32> to vector<64xf32>
    %23 = vector.shape_cast %22 : vector<64xf32> to vector<64x1xf32>
    %c0_10 = arith.constant 0 : index
    %c0_11 = arith.constant 0 : index
    %24 = vector.load %arg5[%c0_10, %c0_11] : memref<64x1xf32, #tpu.memory_space<vmem>>, vector<64x1xf32>
    tpu.vector_store %arg5[%c0_10, %c0_11], %23 {strides = array<i32>} : memref<64x1xf32, #tpu.memory_space<vmem>>, vector<64x1xf32>,
    return
  }
  func.func @transform_0(%arg0: i32) -> (i32, i32) {
    %c0_i32 = arith.constant 0 : i32
    %c0_i32_0 = arith.constant 0 : i32
    %c0_i32_1 = arith.constant 0 : i32
    return %c0_i32, %c0_i32_0 : i32, i32
  }
  func.func @transform_1(%arg0: i32) -> (i32, i32) {
    %c0_i32 = arith.constant 0 : i32
    %c0_i32_0 = arith.constant 0 : i32
    return %arg0, %c0_i32 : i32, i32
  }
  func.func @transform_2(%arg0: i32) -> (i32, i32) {
    %c0_i32 = arith.constant 0 : i32
    %c0_i32_0 = arith.constant 0 : i32
    return %arg0, %c0_i32 : i32, i32
  }
  func.func @transform_3(%arg0: i32) -> (i32, i32) {
    %c0_i32 = arith.constant 0 : i32
    %c0_i32_0 = arith.constant 0 : i32
    return %arg0, %c0_i32 : i32, i32
  }
  func.func @transform_4(%arg0: i32) -> (i32, i32) {
    %c0_i32 = arith.constant 0 : i32
    %c0_i32_0 = arith.constant 0 : i32
    return %arg0, %c0_i32 : i32, i32
  }
}

</mosaic_0001>

<llo_original>
// kernel: nw_kernel_regression.1
$region0: #{nw_kernel_regression.1}
  #allocation0 [shape = 'u32[]', space=smem, size = 0x4, offset = 0x4, fixed_abs, tag = 'smem constant byte address 0x4 - core index']
  #allocation1 [shape = 'u32[72,128]{1,0:T(1,128)}', space=vmem, size = 0x9000, scoped, tag = 'internal scratch']
  #allocation2 [shape = 'f32[1,1]{1,0:T(1,128)S(6)}', space=smem, size = 0x200, scoped, tag = 'scoped memory for nw_kernel_regression.1']
  %s0 = inlined_call_operand.<no memory space> [shape: f32[1,1], index: 0, kind: input, shape index: {}]
  %s1 = inlined_call_operand.vmem [shape: f32[64,1], index: 1, kind: input, shape index: {}]
  %s2 = inlined_call_operand.vmem [shape: f32[64,49], index: 2, kind: input, shape index: {}]
  %s3 = inlined_call_operand.vmem [shape: f32[64,49], index: 3, kind: input, shape index: {}]
  %s4 = inlined_call_operand.vmem [shape: f32[64,1], index: 4, kind: output, shape index: {}]
  %s5 = sld [smem:[#allocation0]]
  $region26: #{nw_kernel_regression.1} parent=0
    _
  %s7 = ssub.s32 1, %s5
  %s8 = scalar_select 0, %s7, %s5
  %9 = sst [smem:[#allocation2]] %s0
  // Predicated region
  $region2: #{nw_kernel_regression.1} parent=0 // pred_check
    _
  $region3: #{nw_kernel_regression.1} parent=0 // pred_check_branch
    %11 = sbr.rel (0) target = $region5
  $region4: #{nw_kernel_regression.1} parent=0 // pred_region
    _
  $region5: #{nw_kernel_regression.1} parent=0 // pred_fallthru
    _
  // Predicated region
  $region6: #{nw_kernel_regression.1} parent=0 // pred_check
    _
  $region7: #{nw_kernel_regression.1} parent=0 // pred_check_branch
    %13 = sbr.rel (0) target = $region9
  $region8: #{nw_kernel_regression.1} parent=0 // pred_region
    _
  $region9: #{nw_kernel_regression.1} parent=0 // pred_fallthru
    _
  // Predicated region
  $region10: #{nw_kernel_regression.1} parent=0 // pred_check
    _
  $region11: #{nw_kernel_regression.1} parent=0 // pred_check_branch
    %15 = sbr.rel (0) target = $region13
  $region12: #{nw_kernel_regression.1} parent=0 // pred_region
    _
  $region13: #{nw_kernel_regression.1} parent=0 // pred_fallthru
    _
  // Predicated region
  $region14: #{nw_kernel_regression.1} parent=0 // pred_check
    _
  $region15: #{nw_kernel_regression.1} parent=0 // pred_check_branch
    %17 = sbr.rel (0) target = $region17
  $region16: #{nw_kernel_regression.1} parent=0 // pred_region
    _
  $region17: #{nw_kernel_regression.1} parent=0 // pred_fallthru
    _
  %s18 = sld [smem:[#allocation2]]
  %s19 = smul.f32 %s18, -0.5
  %s20 = smul.f32 %s19, %s18
  %v21 = vld [vmem:[%s1] sm:$0xff]
  %v22 = vld [vmem:[%s1 + $0x8] sm:$0xff]
  %v23 = vld [vmem:[%s1 + $0x10] sm:$0xff]
  %v24 = vld [vmem:[%s1 + $0x18] sm:$0xff]
  %v25 = vld [vmem:[%s1 + $0x20] sm:$0xff]
  %v26 = vld [vmem:[%s1 + $0x28] sm:$0xff]
  %v27 = vld [vmem:[%s1 + $0x30] sm:$0xff]
  %v28 = vld [vmem:[%s1 + $0x38] sm:$0xff]
  %v29 = vld [vmem:[%s2] sm:$0xff]
  %v30 = vld [vmem:[%s2 + $0x8] sm:$0xff]
  %v31 = vld [vmem:[%s2 + $0x10] sm:$0xff]
  %v32 = vld [vmem:[%s2 + $0x18] sm:$0xff]
  %v33 = vld [vmem:[%s2 + $0x20] sm:$0xff]
  %v34 = vld [vmem:[%s2 + $0x28] sm:$0xff]
  %v35 = vld [vmem:[%s2 + $0x30] sm:$0xff]
  %v36 = vld [vmem:[%s2 + $0x38] sm:$0xff]
  %v37 = vld [vmem:[%s3] sm:$0xff]
  %v38 = vld [vmem:[%s3 + $0x8] sm:$0xff]
  %v39 = vld [vmem:[%s3 + $0x10] sm:$0xff]
  %v40 = vld [vmem:[%s3 + $0x18] sm:$0xff]
  %v41 = vld [vmem:[%s3 + $0x20] sm:$0xff]
  %v42 = vld [vmem:[%s3 + $0x28] sm:$0xff]
  %v43 = vld [vmem:[%s3 + $0x30] sm:$0xff]
  %v44 = vld [vmem:[%s3 + $0x38] sm:$0xff]
  %46 = vset.pattern.permute.xlu0 0
  %47 = vperm.xlu0 %46, %v21
  %v48 = vpop.permute.xlu0 %47
  %51 = vset.pattern.permute.xlu0 0
  %52 = vperm.xlu0 %51, %v22
  %v53 = vpop.permute.xlu0 %52
  %56 = vset.pattern.permute.xlu0 0
  %57 = vperm.xlu0 %56, %v23
  %v58 = vpop.permute.xlu0 %57
  %61 = vset.pattern.permute.xlu0 0
  %62 = vperm.xlu0 %61, %v24
  %v63 = vpop.permute.xlu0 %62
  %66 = vset.pattern.permute.xlu0 0
  %67 = vperm.xlu0 %66, %v25
  %v68 = vpop.permute.xlu0 %67
  %71 = vset.pattern.permute.xlu0 0
  %72 = vperm.xlu0 %71, %v26
  %v73 = vpop.permute.xlu0 %72
  %76 = vset.pattern.permute.xlu0 0
  %77 = vperm.xlu0 %76, %v27
  %v78 = vpop.permute.xlu0 %77
  %81 = vset.pattern.permute.xlu0 0
  %82 = vperm.xlu0 %81, %v28
  %v83 = vpop.permute.xlu0 %82
  %v85 = vsub.f32 %v48, %v29
  %v86 = vsub.f32 %v53, %v30
  %v87 = vsub.f32 %v58, %v31
  %v88 = vsub.f32 %v63, %v32
  %v89 = vsub.f32 %v68, %v33
  %v90 = vsub.f32 %v73, %v34
  %v91 = vsub.f32 %v78, %v35
  %v92 = vsub.f32 %v83, %v36
  %v93 = vmul.f32 %v85, %v85
  %v94 = vmul.f32 %v86, %v86
  %v95 = vmul.f32 %v87, %v87
  %v96 = vmul.f32 %v88, %v88
  %v97 = vmul.f32 %v89, %v89
  %v98 = vmul.f32 %v90, %v90
  %v99 = vmul.f32 %v91, %v91
  %v100 = vmul.f32 %v92, %v92
  %v101 = vstv %s20
  %v102 = vmul.f32 %v93, %v101
  %v103 = vmul.f32 %v94, %v101
  %v104 = vmul.f32 %v95, %v101
  %v105 = vmul.f32 %v96, %v101
  %v106 = vmul.f32 %v97, %v101
  %v107 = vmul.f32 %v98, %v101
  %v108 = vmul.f32 %v99, %v101
  %v109 = vmul.f32 %v100, %v101
  %vm110 = vcmask 400384
  %v111 = vsel %vm110, %v102, -inf
  %112 = vmax.xlane.f32.xlu0 %v111
  %v113 = vpop.xlane.xlu0 %112
  %v114 = vsel %vm110, %v103, -inf
  %115 = vmax.xlane.f32.xlu0 %v114
  %v116 = vpop.xlane.xlu0 %115
  %v117 = vsel %vm110, %v104, -inf
  %118 = vmax.xlane.f32.xlu0 %v117
  %v119 = vpop.xlane.xlu0 %118
  %v120 = vsel %vm110, %v105, -inf
  %121 = vmax.xlane.f32.xlu0 %v120
  %v122 = vpop.xlane.xlu0 %121
  %v123 = vsel %vm110, %v106, -inf
  %124 = vmax.xlane.f32.xlu0 %v123
  %v125 = vpop.xlane.xlu0 %124
  %v126 = vsel %vm110, %v107, -inf
  %127 = vmax.xlane.f32.xlu0 %v126
  %v128 = vpop.xlane.xlu0 %127
  %v129 = vsel %vm110, %v108, -inf
  %130 = vmax.xlane.f32.xlu0 %v129
  %v131 = vpop.xlane.xlu0 %130
  %v132 = vsel %vm110, %v109, -inf
  %133 = vmax.xlane.f32.xlu0 %v132
  %v134 = vpop.xlane.xlu0 %133
  %v135 = vsub.f32 %v102, %v113
  %v136 = vsub.f32 %v103, %v116
  %v137 = vsub.f32 %v104, %v119
  %v138 = vsub.f32 %v105, %v122
  %v139 = vsub.f32 %v106, %v125
  %v140 = vsub.f32 %v107, %v128
  %v141 = vsub.f32 %v108, %v131
  %v142 = vsub.f32 %v109, %v134
  %v143 = vmul.f32 %v135, 1.442695
  %v144 = vpow.pop %v143
  %v145 = vmul.f32 %v136, 1.442695
  %v146 = vpow.pop %v145
  %v147 = vmul.f32 %v137, 1.442695
  %v148 = vpow.pop %v147
  %v149 = vmul.f32 %v138, 1.442695
  %v150 = vpow.pop %v149
  %v151 = vmul.f32 %v139, 1.442695
  %v152 = vpow.pop %v151
  %v153 = vmul.f32 %v140, 1.442695
  %v154 = vpow.pop %v153
  %v155 = vmul.f32 %v141, 1.442695
  %v156 = vpow.pop %v155
  %v157 = vmul.f32 %v142, 1.442695
  %v158 = vpow.pop %v157
  %v159 = vsel %vm110, %v144, 0.0
  %160 = vadd.xlane.f32.xlu0 %v159
  %v161 = vpop.xlane.xlu0 %160
  %v162 = vsel %vm110, %v146, 0.0
  %163 = vadd.xlane.f32.xlu0 %v162
  %v164 = vpop.xlane.xlu0 %163
  %v165 = vsel %vm110, %v148, 0.0
  %166 = vadd.xlane.f32.xlu0 %v165
  %v167 = vpop.xlane.xlu0 %166
  %v168 = vsel %vm110, %v150, 0.0
  %169 = vadd.xlane.f32.xlu0 %v168
  %v170 = vpop.xlane.xlu0 %169
  %v171 = vsel %vm110, %v152, 0.0
  %172 = vadd.xlane.f32.xlu0 %v171
  %v173 = vpop.xlane.xlu0 %172
  %v174 = vsel %vm110, %v154, 0.0
  %175 = vadd.xlane.f32.xlu0 %v174
  %v176 = vpop.xlane.xlu0 %175
  %v177 = vsel %vm110, %v156, 0.0
  %178 = vadd.xlane.f32.xlu0 %v177
  %v179 = vpop.xlane.xlu0 %178
  %v180 = vsel %vm110, %v158, 0.0
  %181 = vadd.xlane.f32.xlu0 %v180
  %v182 = vpop.xlane.xlu0 %181
  %v183 = vrcp.pop %v161
  %v184 = vrcp.pop %v164
  %v185 = vrcp.pop %v167
  %v186 = vrcp.pop %v170
  %v187 = vrcp.pop %v173
  %v188 = vrcp.pop %v176
  %v189 = vrcp.pop %v179
  %v190 = vrcp.pop %v182
  %v191 = vmul.f32 %v144, %v183
  %v192 = vmul.f32 %v146, %v184
  %v193 = vmul.f32 %v148, %v185
  %v194 = vmul.f32 %v150, %v186
  %v195 = vmul.f32 %v152, %v187
  %v196 = vmul.f32 %v154, %v188
  %v197 = vmul.f32 %v156, %v189
  %v198 = vmul.f32 %v158, %v190
  %v199 = vmul.f32 %v191, %v37
  %v200 = vmul.f32 %v192, %v38
  %v201 = vmul.f32 %v193, %v39
  %v202 = vmul.f32 %v194, %v40
  %v203 = vmul.f32 %v195, %v41
  %v204 = vmul.f32 %v196, %v42
  %v205 = vmul.f32 %v197, %v43
  %v206 = vmul.f32 %v198, %v44
  %v207 = vsel %vm110, %v199, 0.0
  %208 = vadd.xlane.f32.xlu0 %v207
  %v209 = vpop.xlane.xlu0 %208
  %v210 = vsel %vm110, %v200, 0.0
  %211 = vadd.xlane.f32.xlu0 %v210
  %v212 = vpop.xlane.xlu0 %211
  %v213 = vsel %vm110, %v201, 0.0
  %214 = vadd.xlane.f32.xlu0 %v213
  %v215 = vpop.xlane.xlu0 %214
  %v216 = vsel %vm110, %v202, 0.0
  %217 = vadd.xlane.f32.xlu0 %v216
  %v218 = vpop.xlane.xlu0 %217
  %v219 = vsel %vm110, %v203, 0.0
  %220 = vadd.xlane.f32.xlu0 %v219
  %v221 = vpop.xlane.xlu0 %220
  %v222 = vsel %vm110, %v204, 0.0
  %223 = vadd.xlane.f32.xlu0 %v222
  %v224 = vpop.xlane.xlu0 %223
  %v225 = vsel %vm110, %v205, 0.0
  %226 = vadd.xlane.f32.xlu0 %v225
  %v227 = vpop.xlane.xlu0 %226
  %v228 = vsel %vm110, %v206, 0.0
  %229 = vadd.xlane.f32.xlu0 %v228
  %v230 = vpop.xlane.xlu0 %229
  %vm231 = vcmask 7168
  %232 = vst.msk [vmem:[%s4] sm:$0xff] %vm231, %v209
  %233 = vst.msk [vmem:[%s4 + $0x8] sm:$0xff] %vm231, %v212
  %234 = vst.msk [vmem:[%s4 + $0x10] sm:$0xff] %vm231, %v215
  %235 = vst.msk [vmem:[%s4 + $0x18] sm:$0xff] %vm231, %v218
  %236 = vst.msk [vmem:[%s4 + $0x20] sm:$0xff] %vm231, %v221
  %237 = vst.msk [vmem:[%s4 + $0x28] sm:$0xff] %vm231, %v224
  %238 = vst.msk [vmem:[%s4 + $0x30] sm:$0xff] %vm231, %v227
  %239 = vst.msk [vmem:[%s4 + $0x38] sm:$0xff] %vm231, %v230
  // Predicated region
  $region18: #{nw_kernel_regression.1} parent=0 // pred_check
    _
  $region19: #{nw_kernel_regression.1} parent=0 // pred_check_branch
    %241 = sbr.rel (0) target = $region21
  $region20: #{nw_kernel_regression.1} parent=0 // pred_region
    _
  $region21: #{nw_kernel_regression.1} parent=0 // pred_fallthru
    _
  // Predicated region
  $region22: #{nw_kernel_regression.1} parent=0 // pred_check
    _
  $region23: #{nw_kernel_regression.1} parent=0 // pred_check_branch
    %243 = sbr.rel (0) target = $region25
  $region24: #{nw_kernel_regression.1} parent=0 // pred_region
    _
  $region25: #{nw_kernel_regression.1} parent=0 // pred_fallthru
    _

</llo_original>
